<compile_context>
chip_gen: v7x
topology: tpu7x:2x2x1
jax: 0.10.0
libtpu: 0.0.40
codegen_flags: <defaults>
</compile_context>

<pallas_src>
import functools

import jax
import jax.numpy as jnp
from jax import lax
from jax.experimental import pallas as pl
from jax.experimental.pallas import tpu as pltpu


def _round_up(v, m):
    return ((v + m - 1) // m) * m


def _sign(v):
    # torch.sign semantics: sign(0) == 0
    return jnp.where(v > 0, 1.0, jnp.where(v < 0, -1.0, 0.0)).astype(v.dtype)


# ---------------------------------------------------------------------------
# Fused (binarize ->) matmul (+ bias) kernel: the workhorse for every
# BinarizeConv2d (via im2col) and BinarizeLinear layer.
# ---------------------------------------------------------------------------
def _matmul_bias_kernel(a_ref, b_ref, bias_ref, o_ref, acc_ref, *,
                        binarize_a, binarize_b):
    k = pl.program_id(2)

    @pl.when(k == 0)
    def _():
        acc_ref[...] = jnp.zeros_like(acc_ref)

    a = a_ref[...]
    b = b_ref[...]
    if binarize_a:
        a = _sign(a)              # fused on the VPU, hidden under the DMA
    if binarize_b:
        b = _sign(b)
    acc_ref[...] += jnp.dot(a, b, preferred_element_type=jnp.float32)

    @pl.when(k == pl.num_programs(2) - 1)
    def _():
        o_ref[...] = (acc_ref[...] + bias_ref[...]).astype(o_ref.dtype)


def pallas_matmul_bias(a, b, bias, *, binarize_a, binarize_b):
    """out = (sign?(a) @ sign?(b)) + bias ; a:(M,K) b:(K,N) bias:(N,)."""
    M, K = a.shape
    K2, N = b.shape
    assert K == K2

    tm = 256 if M >= 256 else _round_up(max(M, 8), 8)
    tn = 256 if N >= 256 else 128
    tk = 512 if K >= 512 else _round_up(max(K, 128), 128)
    Mp, Kp, Np = _round_up(M, tm), _round_up(K, tk), _round_up(N, tn)

    a_p = jnp.pad(a.astype(jnp.float32), ((0, Mp - M), (0, Kp - K)))
    b_p = jnp.pad(b.astype(jnp.float32), ((0, Kp - K), (0, Np - N)))
    bias_p = jnp.pad(bias.astype(jnp.float32), (0, Np - N)).reshape(1, Np)

    grid = (Mp // tm, Np // tn, Kp // tk)
    kern = functools.partial(_matmul_bias_kernel,
                             binarize_a=binarize_a, binarize_b=binarize_b)

    out = pl.pallas_call(
        kern,
        out_shape=jax.ShapeDtypeStruct((Mp, Np), jnp.float32),
        grid_spec=pltpu.PrefetchScalarGridSpec(
            num_scalar_prefetch=0,
            grid=grid,
            in_specs=[
                pl.BlockSpec((tm, tk), lambda i, j, k: (i, k)),
                pl.BlockSpec((tk, tn), lambda i, j, k: (k, j)),
                pl.BlockSpec((1, tn), lambda i, j, k: (0, j)),
            ],
            out_specs=pl.BlockSpec((tm, tn), lambda i, j, k: (i, j)),
            scratch_shapes=[pltpu.VMEM((tm, tn), jnp.float32)],
        ),
        compiler_params=pltpu.CompilerParams(
            dimension_semantics=("parallel", "parallel", "arbitrary")),
    )(a_p, b_p, bias_p)
    return out[:M, :N]


# ---------------------------------------------------------------------------
# Fused BatchNorm-affine (+ optional Hardtanh) kernel, channels-last layout.
# ---------------------------------------------------------------------------
def _affine_act_kernel(x_ref, scale_ref, shift_ref, o_ref, *, hardtanh):
    y = x_ref[...] * scale_ref[...] + shift_ref[...]
    if hardtanh:
        y = jnp.clip(y, -1.0, 1.0)
    o_ref[...] = y


def _batchnorm_act(x2d, gamma, beta, *, eps=1e-5, hardtanh=True):
    # Training-mode batch statistics (fresh nn.BatchNorm default), biased var.
    # TODO(synk): the mean/var reductions are computed in plain JAX, only the
    # per-channel affine + Hardtanh is a Pallas kernel.
    mean = jnp.mean(x2d, axis=0)
    var = jnp.var(x2d, axis=0)
    scale = gamma / jnp.sqrt(var + eps)
    shift = beta - mean * scale

    R, C = x2d.shape
    kern = functools.partial(_affine_act_kernel, hardtanh=hardtanh)
    return pl.pallas_call(
        kern,
        out_shape=jax.ShapeDtypeStruct((R, C), jnp.float32),
        grid_spec=pltpu.PrefetchScalarGridSpec(
            num_scalar_prefetch=0,
            grid=(1,),
            in_specs=[
                pl.BlockSpec((R, C), lambda i: (0, 0)),
                pl.BlockSpec((1, C), lambda i: (0, 0)),
                pl.BlockSpec((1, C), lambda i: (0, 0)),
            ],
            out_specs=pl.BlockSpec((R, C), lambda i: (0, 0)),
        ),
    )(x2d.astype(jnp.float32),
      scale.reshape(1, C).astype(jnp.float32),
      shift.reshape(1, C).astype(jnp.float32))


def batchnorm2d_hardtanh(x, gamma, beta):
    N, C, H, W = x.shape
    x2 = x.transpose(0, 2, 3, 1).reshape(-1, C)
    y2 = _batchnorm_act(x2, gamma, beta, hardtanh=True)
    return y2.reshape(N, H, W, C).transpose(0, 3, 1, 2)


# ---------------------------------------------------------------------------
# LogSoftmax kernel (full block, dim=-1), matches nn.LogSoftmax on (N, classes)
# ---------------------------------------------------------------------------
def _log_softmax_kernel(x_ref, o_ref):
    x = x_ref[...]
    m = jnp.max(x, axis=-1, keepdims=True)
    s = x - m
    lse = jnp.log(jnp.sum(jnp.exp(s), axis=-1, keepdims=True))
    o_ref[...] = s - lse


def log_softmax_pallas(x):
    R, C = x.shape
    return pl.pallas_call(
        _log_softmax_kernel,
        out_shape=jax.ShapeDtypeStruct((R, C), jnp.float32),
        grid_spec=pltpu.PrefetchScalarGridSpec(
            num_scalar_prefetch=0,
            grid=(1,),
            in_specs=[pl.BlockSpec((R, C), lambda i: (0, 0))],
            out_specs=pl.BlockSpec((R, C), lambda i: (0, 0)),
        ),
    )(x.astype(jnp.float32))


# ---------------------------------------------------------------------------
# Conv / Linear / Pool wrappers
# ---------------------------------------------------------------------------
def _im2col_nchw(x, kh, kw, stride, pad):
    """Explicit im2col with channel-major (C, kh, kw) patch ordering."""
    N, C, H, W = x.shape
    Ho = (H + 2 * pad - kh) // stride + 1
    Wo = (W + 2 * pad - kw) // stride + 1
    xp = jnp.pad(x, ((0, 0), (0, 0), (pad, pad), (pad, pad)))
    cols = []
    for i in range(kh):
        i_end = i + stride * (Ho - 1) + 1
        for j in range(kw):
            j_end = j + stride * (Wo - 1) + 1
            cols.append(xp[:, :, i:i_end:stride, j:j_end:stride])
    p = jnp.stack(cols, axis=2)                       # (N, C, kh*kw, Ho, Wo)
    p = p.transpose(0, 3, 4, 1, 2).reshape(N * Ho * Wo, C * kh * kw)
    return p, Ho, Wo


def binarize_conv2d(x, w, b, *, stride, pad, binarize_input):
    N, C, H, W = x.shape
    O, Cw, kh, kw = w.shape
    a, Ho, Wo = _im2col_nchw(x, kh, kw, stride, pad)
    bmat = w.reshape(O, Cw * kh * kw).T
    out = pallas_matmul_bias(a, bmat, b,
                             binarize_a=binarize_input, binarize_b=True)
    return out.reshape(N, Ho, Wo, O).transpose(0, 3, 1, 2)


def binarize_linear(x, w, b):
    return pallas_matmul_bias(x, w.T, b, binarize_a=True, binarize_b=True)


def maxpool2d(x, k=3, s=2):
    # TODO(synk): MaxPool2d(3,2) done with lax.reduce_window (XLA), not Pallas.
    return lax.reduce_window(x, -jnp.inf, lax.max,
                             (1, 1, k, k), (1, 1, s, s), "VALID")


# ---------------------------------------------------------------------------
# Model
# ---------------------------------------------------------------------------
def init_params(key, num_classes=6):
    r = 3
    conv_cfg = [("conv1", 3, 64 * r, 11), ("conv2", 64 * r, 192 * r, 5),
                ("conv3", 192 * r, 384 * r, 3), ("conv4", 384 * r, 256 * r, 3),
                ("conv5", 256 * r, 256, 3)]
    fc_cfg = [("fc1", 256 * 6 * 6, 4096), ("fc2", 4096, 4096),
              ("fc3", 4096, num_classes)]
    params = {}
    for name, cin, cout, k in conv_cfg:
        key, kw_, kb_ = jax.random.split(key, 3)
        params[name + "_w"] = 0.05 * jax.random.normal(kw_, (cout, cin, k, k), jnp.float32)
        params[name + "_b"] = 0.01 * jax.random.normal(kb_, (cout,), jnp.float32)
        params[name + "_bn_g"] = jnp.ones((cout,), jnp.float32)
        params[name + "_bn_b"] = jnp.zeros((cout,), jnp.float32)
    for name, cin, cout in fc_cfg:
        key, kw_, kb_ = jax.random.split(key, 3)
        params[name + "_w"] = 0.05 * jax.random.normal(kw_, (cout, cin), jnp.float32)
        params[name + "_b"] = 0.01 * jax.random.normal(kb_, (cout,), jnp.float32)
        params[name + "_bn_g"] = jnp.ones((cout,), jnp.float32)
        params[name + "_bn_b"] = jnp.zeros((cout,), jnp.float32)
    return params


def binarized_celestial_forward(params, x):
    p = params
    # features
    x = binarize_conv2d(x, p["conv1_w"], p["conv1_b"], stride=4, pad=2,
                        binarize_input=False)        # input has 3 channels
    x = maxpool2d(x)
    x = batchnorm2d_hardtanh(x, p["conv1_bn_g"], p["conv1_bn_b"])

    x = binarize_conv2d(x, p["conv2_w"], p["conv2_b"], stride=1, pad=2,
                        binarize_input=True)
    x = maxpool2d(x)
    x = batchnorm2d_hardtanh(x, p["conv2_bn_g"], p["conv2_bn_b"])

    x = binarize_conv2d(x, p["conv3_w"], p["conv3_b"], stride=1, pad=1,
                        binarize_input=True)
    x = batchnorm2d_hardtanh(x, p["conv3_bn_g"], p["conv3_bn_b"])

    x = binarize_conv2d(x, p["conv4_w"], p["conv4_b"], stride=1, pad=1,
                        binarize_input=True)
    x = batchnorm2d_hardtanh(x, p["conv4_bn_g"], p["conv4_bn_b"])

    x = binarize_conv2d(x, p["conv5_w"], p["conv5_b"], stride=1, pad=1,
                        binarize_input=True)
    x = maxpool2d(x)
    x = batchnorm2d_hardtanh(x, p["conv5_bn_g"], p["conv5_bn_b"])

    # classifier
    x = x.reshape(-1, 256 * 6 * 6)
    x = binarize_linear(x, p["fc1_w"], p["fc1_b"])
    x = _batchnorm_act(x, p["fc1_bn_g"], p["fc1_bn_b"], hardtanh=True)
    x = binarize_linear(x, p["fc2_w"], p["fc2_b"])
    x = _batchnorm_act(x, p["fc2_bn_g"], p["fc2_bn_b"], hardtanh=True)
    x = binarize_linear(x, p["fc3_w"], p["fc3_b"])
    x = _batchnorm_act(x, p["fc3_bn_g"], p["fc3_bn_b"], hardtanh=False)
    return log_softmax_pallas(x)


if __name__ == "__main__":
    # Quick self-check of the fused binarize+matmul kernel vs XLA (exact on
    # sign-valued operands).
    ka, kb = jax.random.split(jax.random.PRNGKey(1))
    at = jax.random.normal(ka, (130, 300), jnp.float32)
    bt = jax.random.normal(kb, (300, 70), jnp.float32)
    got = pallas_matmul_bias(at, bt, jnp.zeros((70,), jnp.float32),
                             binarize_a=True, binarize_b=True)
    ref = _sign(at) @ _sign(bt)
    assert jnp.allclose(got, ref, atol=1e-3), "matmul self-check failed"

    key = jax.random.PRNGKey(0)
    kp, kx = jax.random.split(key)
    params = init_params(kp, num_classes=6)
    # AlexNet-style geometry: 3x224x224 input is required so that the feature
    # map flattens to 256*6*6 before the classifier; batch=2.
    x = jax.random.normal(kx, (2, 3, 224, 224), jnp.float32)

    fwd = jax.jit(binarized_celestial_forward)
    out = fwd(params, x)
    jax.block_until_ready(out)

    assert out.shape == (2, 6), out.shape
    assert bool(jnp.all(jnp.isfinite(out)))
    # rows of log-softmax must exponentiate-sum to 1
    assert bool(jnp.allclose(jnp.sum(jnp.exp(out), axis=-1), 1.0, atol=1e-3))

    print("KERNEL_OK")
</pallas_src>

<mosaic_0001>
module attributes {stable_mosaic.version = 11 : i64} {
  func.func @_matmul_bias_kernel(%arg0: i32, %arg1: i32, %arg2: i32, %arg3: memref<136x384xf32, #tpu.memory_space<vmem>>, %arg4: memref<384x128xf32, #tpu.memory_space<vmem>>, %arg5: memref<1x128xf32, #tpu.memory_space<vmem>>, %arg6: memref<136x128xf32, #tpu.memory_space<vmem>>, %arg7: memref<136x128xf32, #tpu.memory_space<vmem>>) attributes {dimension_semantics = [#tpu.dimension_semantics<parallel>, #tpu.dimension_semantics<parallel>, #tpu.dimension_semantics<arbitrary>], iteration_bounds = array<i64: 1, 1, 1>, scalar_prefetch = 0 : i64, scratch_operands = 1 : i64, tpu.core_type = #tpu.core_type<tc>, window_params = [{transform_indices = @transform_0, window_bounds = array<i64: 136, 384>}, {transform_indices = @transform_1, window_bounds = array<i64: 384, 128>}, {transform_indices = @transform_2, window_bounds = array<i64: 1, 128>}, {transform_indices = @transform_3, window_bounds = array<i64: 136, 128>}]} {
    %c0_i32 = arith.constant 0 : i32
    %0 = arith.cmpi eq, %arg2, %c0_i32 : i32
    %1 = arith.extui %0 : i1 to i32
    %c0_i32_0 = arith.constant 0 : i32
    %2 = arith.cmpi ne, %1, %c0_i32_0 : i32
    scf.if %2 {
      %cst_20 = arith.constant 0.000000e+00 : f32
      %30 = vector.broadcast %cst_20 : f32 to vector<136x128xf32>
      %c0_21 = arith.constant 0 : index
      %c0_22 = arith.constant 0 : index
      %31 = vector.load %arg7[%c0_21, %c0_22] : memref<136x128xf32, #tpu.memory_space<vmem>>, vector<136x128xf32>
      tpu.vector_store %arg7[%c0_21, %c0_22], %30 {strides = array<i32>} : memref<136x128xf32, #tpu.memory_space<vmem>>, vector<136x128xf32>,
    } else {
    }
    %c0 = arith.constant 0 : index
    %c0_1 = arith.constant 0 : index
    %3 = vector.load %arg3[%c0, %c0_1] : memref<136x384xf32, #tpu.memory_space<vmem>>, vector<136x384xf32>
    %c0_2 = arith.constant 0 : index
    %c0_3 = arith.constant 0 : index
    %4 = vector.load %arg4[%c0_2, %c0_3] : memref<384x128xf32, #tpu.memory_space<vmem>>, vector<384x128xf32>
    %cst = arith.constant 0.000000e+00 : f32
    %5 = vector.broadcast %cst : f32 to vector<136x384xf32>
    %6 = arith.cmpf ogt, %3, %5 : vector<136x384xf32>
    %cst_4 = arith.constant 0.000000e+00 : f32
    %7 = vector.broadcast %cst_4 : f32 to vector<136x384xf32>
    %8 = arith.cmpf olt, %3, %7 : vector<136x384xf32>
    %cst_5 = arith.constant -1.000000e+00 : f32
    %cst_6 = arith.constant 0.000000e+00 : f32
    %9 = vector.broadcast %cst_5 : f32 to vector<136x384xf32>
    %10 = vector.broadcast %cst_6 : f32 to vector<136x384xf32>
    %11 = arith.select %8, %9, %10 : vector<136x384xi1>, vector<136x384xf32>
    %cst_7 = arith.constant 1.000000e+00 : f32
    %12 = vector.broadcast %cst_7 : f32 to vector<136x384xf32>
    %13 = arith.select %6, %12, %11 : vector<136x384xi1>, vector<136x384xf32>
    %cst_8 = arith.constant 0.000000e+00 : f32
    %14 = vector.broadcast %cst_8 : f32 to vector<384x128xf32>
    %15 = arith.cmpf ogt, %4, %14 : vector<384x128xf32>
    %cst_9 = arith.constant 0.000000e+00 : f32
    %16 = vector.broadcast %cst_9 : f32 to vector<384x128xf32>
    %17 = arith.cmpf olt, %4, %16 : vector<384x128xf32>
    %cst_10 = arith.constant -1.000000e+00 : f32
    %cst_11 = arith.constant 0.000000e+00 : f32
    %18 = vector.broadcast %cst_10 : f32 to vector<384x128xf32>
    %19 = vector.broadcast %cst_11 : f32 to vector<384x128xf32>
    %20 = arith.select %17, %18, %19 : vector<384x128xi1>, vector<384x128xf32>
    %cst_12 = arith.constant 1.000000e+00 : f32
    %21 = vector.broadcast %cst_12 : f32 to vector<384x128xf32>
    %22 = arith.select %15, %21, %20 : vector<384x128xi1>, vector<384x128xf32>
    %c0_13 = arith.constant 0 : index
    %c0_14 = arith.constant 0 : index
    %23 = vector.load %arg7[%c0_13, %c0_14] : memref<136x128xf32, #tpu.memory_space<vmem>>, vector<136x128xf32>
    %cst_15 = arith.constant dense<0.000000e+00> : vector<136x128xf32>
    %24 = tpu.matmul %13, %22, %cst_15 {dimension_numbers = #tpu.dot_dimension_numbers<[1], [0], [0], [1], [0, 0, 1, 1], [], []>} : vector<136x384xf32>, vector<384x128xf32>, vector<136x128xf32> -> vector<136x128xf32>
    %25 = arith.addf %23, %24 : vector<136x128xf32>
    %c0_16 = arith.constant 0 : index
    %c0_17 = arith.constant 0 : index
    %26 = vector.load %arg7[%c0_16, %c0_17] : memref<136x128xf32, #tpu.memory_space<vmem>>, vector<136x128xf32>
    tpu.vector_store %arg7[%c0_16, %c0_17], %25 {strides = array<i32>} : memref<136x128xf32, #tpu.memory_space<vmem>>, vector<136x128xf32>,
    %c0_i32_18 = arith.constant 0 : i32
    %27 = arith.cmpi eq, %arg2, %c0_i32_18 : i32
    %28 = arith.extui %27 : i1 to i32
    %c0_i32_19 = arith.constant 0 : i32
    %29 = arith.cmpi ne, %28, %c0_i32_19 : i32
    scf.if %29 {
      %c0_20 = arith.constant 0 : index
      %c0_21 = arith.constant 0 : index
      %30 = vector.load %arg7[%c0_20, %c0_21] : memref<136x128xf32, #tpu.memory_space<vmem>>, vector<136x128xf32>
      %c0_22 = arith.constant 0 : index
      %c0_23 = arith.constant 0 : index
      %31 = vector.load %arg5[%c0_22, %c0_23] : memref<1x128xf32, #tpu.memory_space<vmem>>, vector<1x128xf32>
      %32 = vector.broadcast %31 : vector<1x128xf32> to vector<136x128xf32>
      %33 = arith.addf %30, %32 : vector<136x128xf32>
      %c0_24 = arith.constant 0 : index
      %c0_25 = arith.constant 0 : index
      %34 = vector.load %arg6[%c0_24, %c0_25] : memref<136x128xf32, #tpu.memory_space<vmem>>, vector<136x128xf32>
      tpu.vector_store %arg6[%c0_24, %c0_25], %33 {strides = array<i32>} : memref<136x128xf32, #tpu.memory_space<vmem>>, vector<136x128xf32>,
    } else {
    }
    return
  }
  func.func @transform_0(%arg0: i32, %arg1: i32, %arg2: i32) -> (i32, i32) {
    %c0_i32 = arith.constant 0 : i32
    return %arg0, %arg2 : i32, i32
  }
  func.func @transform_1(%arg0: i32, %arg1: i32, %arg2: i32) -> (i32, i32) {
    %c0_i32 = arith.constant 0 : i32
    return %arg2, %arg1 : i32, i32
  }
  func.func @transform_2(%arg0: i32, %arg1: i32, %arg2: i32) -> (i32, i32) {
    %c0_i32 = arith.constant 0 : i32
    %c0_i32_0 = arith.constant 0 : i32
    return %c0_i32, %arg1 : i32, i32
  }
  func.func @transform_3(%arg0: i32, %arg1: i32, %arg2: i32) -> (i32, i32) {
    %c0_i32 = arith.constant 0 : i32
    return %arg0, %arg1 : i32, i32
  }
}

</mosaic_0001>

<llo_original>
// kernel: tpu_custom_call.1
$region0: #{tpu_custom_call.1}
  #allocation0 [shape = 'u32[]', space=smem, size = 0x4, offset = 0x4, fixed_abs, tag = 'smem constant byte address 0x4 - core index']
  #allocation1 [shape = 'u32[144,128]{1,0:T(1,128)}', space=vmem, size = 0x12000, scoped, tag = 'internal scratch']
  #allocation2 [shape = 'f32[136,128]{1,0:T(8,128)}', space=vmem, size = 0x11000, scoped, tag = 'scratch operand']
  %s0 = inlined_call_operand.hbm [shape: f32[136,384], index: 0, kind: input, shape index: {}]
  %s1 = inlined_call_operand.hbm [shape: f32[384,128], index: 1, kind: input, shape index: {}]
  %s2 = inlined_call_operand.vmem [shape: f32[1,128], index: 2, kind: input, shape index: {}]
  %s3 = inlined_call_operand.hbm [shape: f32[136,128], index: 3, kind: output, shape index: {}]
  %s4 = sld [smem:[#allocation0]]
  $region38: #{tpu_custom_call.1} parent=0
    _
  %s6 = ssub.s32 1, %s4
  %s7 = scalar_select 0, %s6, %s4
  $region1: #{tpu_custom_call.1} parent=0
    #allocation3 [shape = 'u8[208896]{0}', space=vmem, size = 0x33000, scoped, tag = 'input window, operand 0, single buffered']
    #allocation4 [shape = 's32[1]{0}', space=sflag, size = 0x4, scoped, tag = 'scoped memory for tpu_custom_call.1']
    #allocation5 [shape = 's32[1]{0}', space=sflag, size = 0x4, scoped, tag = 'scoped memory for tpu_custom_call.1']
    #allocation6 [shape = 'u8[196608]{0}', space=vmem, size = 0x30000, scoped, tag = 'input window, operand 1, single buffered']
    #allocation7 [shape = 's32[1]{0}', space=sflag, size = 0x4, scoped, tag = 'scoped memory for tpu_custom_call.1']
    #allocation8 [shape = 'u8[69632]{0}', space=vmem, size = 0x11000, scoped, tag = 'output window, operand 0, single buffered']
    %8 = vsyncpa [#allocation4], 0
    %9 = vsyncpa [#allocation7], 0
    %10 = vsyncpa [#allocation5], 0
    // Predicated region
    $region2: #{tpu_custom_call.1} parent=1 // pred_check
      _
    $region3: #{tpu_custom_call.1} parent=1 // pred_check_branch
      %12 = sbr.rel (0) target = $region5
    $region4: #{tpu_custom_call.1} parent=1 // pred_region
      %s14 = ssub.s32 6528, 6528
      %15 = vsyncadd [#allocation4], %s14
      %s16 = sshll.u32 [#allocation3], 4
      %s17 = int_to_ptr.vmem [resolvable:$true] %s16
      %22 = dma.hbm_to_vmem [thread:$0]  %s0, 6528, %s17, [#allocation4], 384, 384, 24
    $region5: #{tpu_custom_call.1} parent=1 // pred_fallthru
      _
    // Predicated region
    $region6: #{tpu_custom_call.1} parent=1 // pred_check
      _
    $region7: #{tpu_custom_call.1} parent=1 // pred_check_branch
      %24 = sbr.rel (0) target = $region9
    $region8: #{tpu_custom_call.1} parent=1 // pred_region
      %s26 = ssub.s32 6144, 6144
      %27 = vsyncadd [#allocation7], %s26
      %s28 = sshll.u32 [#allocation6], 4
      %s29 = int_to_ptr.vmem [resolvable:$true] %s28
      %34 = dma.hbm_to_vmem [thread:$0]  %s1, 6144, %s29, [#allocation7], 128, 128, 8
    $region9: #{tpu_custom_call.1} parent=1 // pred_fallthru
      _
    // Predicated region
    $region10: #{tpu_custom_call.1} parent=1 // pred_check
      _
    $region11: #{tpu_custom_call.1} parent=1 // pred_check_branch
      %36 = sbr.rel (0) target = $region13
    $region12: #{tpu_custom_call.1} parent=1 // pred_region
      _
    $region13: #{tpu_custom_call.1} parent=1 // pred_fallthru
      _
    // Predicated region
    $region14: #{tpu_custom_call.1} parent=1 // pred_check
      _
    $region15: #{tpu_custom_call.1} parent=1 // pred_check_branch
      %38 = sbr.rel (0) target = $region17
    $region16: #{tpu_custom_call.1} parent=1 // pred_region
      %39 = dma.done [#allocation4], 6528
    $region17: #{tpu_custom_call.1} parent=1 // pred_fallthru
      _
    // Predicated region
    $region18: #{tpu_custom_call.1} parent=1 // pred_check
      _
    $region19: #{tpu_custom_call.1} parent=1 // pred_check_branch
      %41 = sbr.rel (0) target = $region21
    $region20: #{tpu_custom_call.1} parent=1 // pred_region
      %42 = dma.done [#allocation7], 6144
    $region21: #{tpu_custom_call.1} parent=1 // pred_fallthru
      _
    %p43 = scmp.eq.s32.totalorder 0, 0
    // Predicated region
    $region22: #{tpu_custom_call.1} parent=1 // pred_check
      %p44 = pneg %p43
    $region23: #{tpu_custom_call.1} parent=1 // pred_check_branch
      %46 = sbr.rel (%p44) target = $region25
    $region24: #{tpu_custom_call.1} parent=1 // pred_region
      %47 = vst [vmem:[#allocation2] sm:$0xff] 0.0
      %48 = vst [vmem:[#allocation2 + $0x8] sm:$0xff] 0.0
      %49 = vst [vmem:[#allocation2 + $0x10] sm:$0xff] 0.0
      %50 = vst [vmem:[#allocation2 + $0x18] sm:$0xff] 0.0
      %51 = vst [vmem:[#allocation2 + $0x20] sm:$0xff] 0.0
      %52 = vst [vmem:[#allocation2 + $0x28] sm:$0xff] 0.0
      %53 = vst [vmem:[#allocation2 + $0x30] sm:$0xff] 0.0
      %54 = vst [vmem:[#allocation2 + $0x38] sm:$0xff] 0.0
      %55 = vst [vmem:[#allocation2 + $0x40] sm:$0xff] 0.0
      %56 = vst [vmem:[#allocation2 + $0x48] sm:$0xff] 0.0
      %57 = vst [vmem:[#allocation2 + $0x50] sm:$0xff] 0.0
      %58 = vst [vmem:[#allocation2 + $0x58] sm:$0xff] 0.0
      %59 = vst [vmem:[#allocation2 + $0x60] sm:$0xff] 0.0
      %60 = vst [vmem:[#allocation2 + $0x68] sm:$0xff] 0.0
      %61 = vst [vmem:[#allocation2 + $0x70] sm:$0xff] 0.0
      %62 = vst [vmem:[#allocation2 + $0x78] sm:$0xff] 0.0
      %63 = vst [vmem:[#allocation2 + $0x80] sm:$0xff] 0.0
    $region25: #{tpu_custom_call.1} parent=1 // pred_fallthru
      _
    %v64 = vld [vmem:[#allocation3] sm:$0xff]
    %v65 = vld [vmem:[#allocation3 + $0x8] sm:$0xff]
    %v66 = vld [vmem:[#allocation3 + $0x10] sm:$0xff]
    %v67 = vld [vmem:[#allocation3 + $0x18] sm:$0xff]
    %v68 = vld [vmem:[#allocation3 + $0x20] sm:$0xff]
    %v69 = vld [vmem:[#allocation3 + $0x28] sm:$0xff]
    %v70 = vld [vmem:[#allocation3 + $0x30] sm:$0xff]
    %v71 = vld [vmem:[#allocation3 + $0x38] sm:$0xff]
    %v72 = vld [vmem:[#allocation3 + $0x40] sm:$0xff]
    %v73 = vld [vmem:[#allocation3 + $0x48] sm:$0xff]
    %v74 = vld [vmem:[#allocation3 + $0x50] sm:$0xff]
    %v75 = vld [vmem:[#allocation3 + $0x58] sm:$0xff]
    %v76 = vld [vmem:[#allocation3 + $0x60] sm:$0xff]
    %v77 = vld [vmem:[#allocation3 + $0x68] sm:$0xff]
    %v78 = vld [vmem:[#allocation3 + $0x70] sm:$0xff]
    %v79 = vld [vmem:[#allocation3 + $0x78] sm:$0xff]
    %v80 = vld [vmem:[#allocation3 + $0x80] sm:$0xff]
    %v81 = vld [vmem:[#allocation3 + $0x88] sm:$0xff]
    %v82 = vld [vmem:[#allocation3 + $0x90] sm:$0xff]
    %v83 = vld [vmem:[#allocation3 + $0x98] sm:$0xff]
    %v84 = vld [vmem:[#allocation3 + $0xa0] sm:$0xff]
    %v85 = vld [vmem:[#allocation3 + $0xa8] sm:$0xff]
    %v86 = vld [vmem:[#allocation3 + $0xb0] sm:$0xff]
    %v87 = vld [vmem:[#allocation3 + $0xb8] sm:$0xff]
    %v88 = vld [vmem:[#allocation3 + $0xc0] sm:$0xff]
    %v89 = vld [vmem:[#allocation3 + $0xc8] sm:$0xff]
    %v90 = vld [vmem:[#allocation3 + $0xd0] sm:$0xff]
    %v91 = vld [vmem:[#allocation3 + $0xd8] sm:$0xff]
    %v92 = vld [vmem:[#allocation3 + $0xe0] sm:$0xff]
    %v93 = vld [vmem:[#allocation3 + $0xe8] sm:$0xff]
    %v94 = vld [vmem:[#allocation3 + $0xf0] sm:$0xff]
    %v95 = vld [vmem:[#allocation3 + $0xf8] sm:$0xff]
    %v96 = vld [vmem:[#allocation3 + $0x100] sm:$0xff]
    %v97 = vld [vmem:[#allocation3 + $0x108] sm:$0xff]
    %v98 = vld [vmem:[#allocation3 + $0x110] sm:$0xff]
    %v99 = vld [vmem:[#allocation3 + $0x118] sm:$0xff]
    %v100 = vld [vmem:[#allocation3 + $0x120] sm:$0xff]
    %v101 = vld [vmem:[#allocation3 + $0x128] sm:$0xff]
    %v102 = vld [vmem:[#allocation3 + $0x130] sm:$0xff]
    %v103 = vld [vmem:[#allocation3 + $0x138] sm:$0xff]
    %v104 = vld [vmem:[#allocation3 + $0x140] sm:$0xff]
    %v105 = vld [vmem:[#allocation3 + $0x148] sm:$0xff]
    %v106 = vld [vmem:[#allocation3 + $0x150] sm:$0xff]
    %v107 = vld [vmem:[#allocation3 + $0x158] sm:$0xff]
    %v108 = vld [vmem:[#allocation3 + $0x160] sm:$0xff]
    %v109 = vld [vmem:[#allocation3 + $0x168] sm:$0xff]
    %v110 = vld [vmem:[#allocation3 + $0x170] sm:$0xff]
    %v111 = vld [vmem:[#allocation3 + $0x178] sm:$0xff]
    %v112 = vld [vmem:[#allocation3 + $0x180] sm:$0xff]
    %v113 = vld [vmem:[#allocation3 + $0x188] sm:$0xff]
    %v114 = vld [vmem:[#allocation3 + $0x190] sm:$0xff]
    %v115 = vld [vmem:[#allocation6] sm:$0xff]
    %v116 = vld [vmem:[#allocation6 + $0x8] sm:$0xff]
    %v117 = vld [vmem:[#allocation6 + $0x10] sm:$0xff]
    %v118 = vld [vmem:[#allocation6 + $0x18] sm:$0xff]
    %v119 = vld [vmem:[#allocation6 + $0x20] sm:$0xff]
    %v120 = vld [vmem:[#allocation6 + $0x28] sm:$0xff]
    %v121 = vld [vmem:[#allocation6 + $0x30] sm:$0xff]
    %v122 = vld [vmem:[#allocation6 + $0x38] sm:$0xff]
    %v123 = vld [vmem:[#allocation6 + $0x40] sm:$0xff]
    %v124 = vld [vmem:[#allocation6 + $0x48] sm:$0xff]
    %v125 = vld [vmem:[#allocation6 + $0x50] sm:$0xff]
    %v126 = vld [vmem:[#allocation6 + $0x58] sm:$0xff]
    %v127 = vld [vmem:[#allocation6 + $0x60] sm:$0xff]
    %v128 = vld [vmem:[#allocation6 + $0x68] sm:$0xff]
    %v129 = vld [vmem:[#allocation6 + $0x70] sm:$0xff]
    %v130 = vld [vmem:[#allocation6 + $0x78] sm:$0xff]
    %v131 = vld [vmem:[#allocation6 + $0x80] sm:$0xff]
    %v132 = vld [vmem:[#allocation6 + $0x88] sm:$0xff]
    %v133 = vld [vmem:[#allocation6 + $0x90] sm:$0xff]
    %v134 = vld [vmem:[#allocation6 + $0x98] sm:$0xff]
    %v135 = vld [vmem:[#allocation6 + $0xa0] sm:$0xff]
    %v136 = vld [vmem:[#allocation6 + $0xa8] sm:$0xff]
    %v137 = vld [vmem:[#allocation6 + $0xb0] sm:$0xff]
    %v138 = vld [vmem:[#allocation6 + $0xb8] sm:$0xff]
    %v139 = vld [vmem:[#allocation6 + $0xc0] sm:$0xff]
    %v140 = vld [vmem:[#allocation6 + $0xc8] sm:$0xff]
    %v141 = vld [vmem:[#allocation6 + $0xd0] sm:$0xff]
    %v142 = vld [vmem:[#allocation6 + $0xd8] sm:$0xff]
    %v143 = vld [vmem:[#allocation6 + $0xe0] sm:$0xff]
    %v144 = vld [vmem:[#allocation6 + $0xe8] sm:$0xff]
    %v145 = vld [vmem:[#allocation6 + $0xf0] sm:$0xff]
    %v146 = vld [vmem:[#allocation6 + $0xf8] sm:$0xff]
    %v147 = vld [vmem:[#allocation6 + $0x100] sm:$0xff]
    %v148 = vld [vmem:[#allocation6 + $0x108] sm:$0xff]
    %v149 = vld [vmem:[#allocation6 + $0x110] sm:$0xff]
    %v150 = vld [vmem:[#allocation6 + $0x118] sm:$0xff]
    %v151 = vld [vmem:[#allocation6 + $0x120] sm:$0xff]
    %v152 = vld [vmem:[#allocation6 + $0x128] sm:$0xff]
    %v153 = vld [vmem:[#allocation6 + $0x130] sm:$0xff]
    %v154 = vld [vmem:[#allocation6 + $0x138] sm:$0xff]
    %v155 = vld [vmem:[#allocation6 + $0x140] sm:$0xff]
    %v156 = vld [vmem:[#allocation6 + $0x148] sm:$0xff]
    %v157 = vld [vmem:[#allocation6 + $0x150] sm:$0xff]
    %v158 = vld [vmem:[#allocation6 + $0x158] sm:$0xff]
    %v159 = vld [vmem:[#allocation6 + $0x160] sm:$0xff]
    %v160 = vld [vmem:[#allocation6 + $0x168] sm:$0xff]
    %v161 = vld [vmem:[#allocation6 + $0x170] sm:$0xff]
    %v162 = vld [vmem:[#allocation6 + $0x178] sm:$0xff]
    %vm163 = vcmp.gt.f32.partialorder %v64, 0.0
    %vm164 = vcmp.gt.f32.partialorder %v65, 0.0
    %vm165 = vcmp.gt.f32.partialorder %v66, 0.0
    %vm166 = vcmp.gt.f32.partialorder %v67, 0.0
    %vm167 = vcmp.gt.f32.partialorder %v68, 0.0
    %vm168 = vcmp.gt.f32.partialorder %v69, 0.0
    %vm169 = vcmp.gt.f32.partialorder %v70, 0.0
    %vm170 = vcmp.gt.f32.partialorder %v71, 0.0
    %vm171 = vcmp.gt.f32.partialorder %v72, 0.0
    %vm172 = vcmp.gt.f32.partialorder %v73, 0.0
    %vm173 = vcmp.gt.f32.partialorder %v74, 0.0
    %vm174 = vcmp.gt.f32.partialorder %v75, 0.0
    %vm175 = vcmp.gt.f32.partialorder %v76, 0.0
    %vm176 = vcmp.gt.f32.partialorder %v77, 0.0
    %vm177 = vcmp.gt.f32.partialorder %v78, 0.0
    %vm178 = vcmp.gt.f32.partialorder %v79, 0.0
    %vm179 = vcmp.gt.f32.partialorder %v80, 0.0
    %vm180 = vcmp.gt.f32.partialorder %v81, 0.0
    %vm181 = vcmp.gt.f32.partialorder %v82, 0.0
    %vm182 = vcmp.gt.f32.partialorder %v83, 0.0
    %vm183 = vcmp.gt.f32.partialorder %v84, 0.0
    %vm184 = vcmp.gt.f32.partialorder %v85, 0.0
    %vm185 = vcmp.gt.f32.partialorder %v86, 0.0
    %vm186 = vcmp.gt.f32.partialorder %v87, 0.0
    %vm187 = vcmp.gt.f32.partialorder %v88, 0.0
    %vm188 = vcmp.gt.f32.partialorder %v89, 0.0
    %vm189 = vcmp.gt.f32.partialorder %v90, 0.0
    %vm190 = vcmp.gt.f32.partialorder %v91, 0.0
    %vm191 = vcmp.gt.f32.partialorder %v92, 0.0
    %vm192 = vcmp.gt.f32.partialorder %v93, 0.0
    %vm193 = vcmp.gt.f32.partialorder %v94, 0.0
    %vm194 = vcmp.gt.f32.partialorder %v95, 0.0
    %vm195 = vcmp.gt.f32.partialorder %v96, 0.0
    %vm196 = vcmp.gt.f32.partialorder %v97, 0.0
    %vm197 = vcmp.gt.f32.partialorder %v98, 0.0
    %vm198 = vcmp.gt.f32.partialorder %v99, 0.0
    %vm199 = vcmp.gt.f32.partialorder %v100, 0.0
    %vm200 = vcmp.gt.f32.partialorder %v101, 0.0
    %vm201 = vcmp.gt.f32.partialorder %v102, 0.0
    %vm202 = vcmp.gt.f32.partialorder %v103, 0.0
    %vm203 = vcmp.gt.f32.partialorder %v104, 0.0
    %vm204 = vcmp.gt.f32.partialorder %v105, 0.0
    %vm205 = vcmp.gt.f32.partialorder %v106, 0.0
    %vm206 = vcmp.gt.f32.partialorder %v107, 0.0
    %vm207 = vcmp.gt.f32.partialorder %v108, 0.0
    %vm208 = vcmp.gt.f32.partialorder %v109, 0.0
    %vm209 = vcmp.gt.f32.partialorder %v110, 0.0
    %vm210 = vcmp.gt.f32.partialorder %v111, 0.0
    %vm211 = vcmp.gt.f32.partialorder %v112, 0.0
    %vm212 = vcmp.gt.f32.partialorder %v113, 0.0
    %vm213 = vcmp.gt.f32.partialorder %v114, 0.0
    %vm214 = vcmp.lt.f32.partialorder %v64, 0.0
    %vm215 = vcmp.lt.f32.partialorder %v65, 0.0
    %vm216 = vcmp.lt.f32.partialorder %v66, 0.0
    %vm217 = vcmp.lt.f32.partialorder %v67, 0.0
    %vm218 = vcmp.lt.f32.partialorder %v68, 0.0
    %vm219 = vcmp.lt.f32.partialorder %v69, 0.0
    %vm220 = vcmp.lt.f32.partialorder %v70, 0.0
    %vm221 = vcmp.lt.f32.partialorder %v71, 0.0
    %vm222 = vcmp.lt.f32.partialorder %v72, 0.0
    %vm223 = vcmp.lt.f32.partialorder %v73, 0.0
    %vm224 = vcmp.lt.f32.partialorder %v74, 0.0
    %vm225 = vcmp.lt.f32.partialorder %v75, 0.0
    %vm226 = vcmp.lt.f32.partialorder %v76, 0.0
    %vm227 = vcmp.lt.f32.partialorder %v77, 0.0
    %vm228 = vcmp.lt.f32.partialorder %v78, 0.0
    %vm229 = vcmp.lt.f32.partialorder %v79, 0.0
    %vm230 = vcmp.lt.f32.partialorder %v80, 0.0
    %vm231 = vcmp.lt.f32.partialorder %v81, 0.0
    %vm232 = vcmp.lt.f32.partialorder %v82, 0.0
    %vm233 = vcmp.lt.f32.partialorder %v83, 0.0
    %vm234 = vcmp.lt.f32.partialorder %v84, 0.0
    %vm235 = vcmp.lt.f32.partialorder %v85, 0.0
    %vm236 = vcmp.lt.f32.partialorder %v86, 0.0
    %vm237 = vcmp.lt.f32.partialorder %v87, 0.0
    %vm238 = vcmp.lt.f32.partialorder %v88, 0.0
    %vm239 = vcmp.lt.f32.partialorder %v89, 0.0
    %vm240 = vcmp.lt.f32.partialorder %v90, 0.0
    %vm241 = vcmp.lt.f32.partialorder %v91, 0.0
    %vm242 = vcmp.lt.f32.partialorder %v92, 0.0
    %vm243 = vcmp.lt.f32.partialorder %v93, 0.0
    %vm244 = vcmp.lt.f32.partialorder %v94, 0.0
    %vm245 = vcmp.lt.f32.partialorder %v95, 0.0
    %vm246 = vcmp.lt.f32.partialorder %v96, 0.0
    %vm247 = vcmp.lt.f32.partialorder %v97, 0.0
    %vm248 = vcmp.lt.f32.partialorder %v98, 0.0
    %vm249 = vcmp.lt.f32.partialorder %v99, 0.0
    %vm250 = vcmp.lt.f32.partialorder %v100, 0.0
    %vm251 = vcmp.lt.f32.partialorder %v101, 0.0
    %vm252 = vcmp.lt.f32.partialorder %v102, 0.0
    %vm253 = vcmp.lt.f32.partialorder %v103, 0.0
    %vm254 = vcmp.lt.f32.partialorder %v104, 0.0
    %vm255 = vcmp.lt.f32.partialorder %v105, 0.0
    %vm256 = vcmp.lt.f32.partialorder %v106, 0.0
    %vm257 = vcmp.lt.f32.partialorder %v107, 0.0
    %vm258 = vcmp.lt.f32.partialorder %v108, 0.0
    %vm259 = vcmp.lt.f32.partialorder %v109, 0.0
    %vm260 = vcmp.lt.f32.partialorder %v110, 0.0
    %vm261 = vcmp.lt.f32.partialorder %v111, 0.0
    %vm262 = vcmp.lt.f32.partialorder %v112, 0.0
    %vm263 = vcmp.lt.f32.partialorder %v113, 0.0
    %vm264 = vcmp.lt.f32.partialorder %v114, 0.0
    %v265 = vsel %vm214, -1.0, 0.0
    %v266 = vsel %vm215, -1.0, 0.0
    %v267 = vsel %vm216, -1.0, 0.0
    %v268 = vsel %vm217, -1.0, 0.0
    %v269 = vsel %vm218, -1.0, 0.0
    %v270 = vsel %vm219, -1.0, 0.0
    %v271 = vsel %vm220, -1.0, 0.0
    %v272 = vsel %vm221, -1.0, 0.0
    %v273 = vsel %vm222, -1.0, 0.0
    %v274 = vsel %vm223, -1.0, 0.0
    %v275 = vsel %vm224, -1.0, 0.0
    %v276 = vsel %vm225, -1.0, 0.0
    %v277 = vsel %vm226, -1.0, 0.0
    %v278 = vsel %vm227, -1.0, 0.0
    %v279 = vsel %vm228, -1.0, 0.0
    %v280 = vsel %vm229, -1.0, 0.0
    %v281 = vsel %vm230, -1.0, 0.0
    %v282 = vsel %vm231, -1.0, 0.0
    %v283 = vsel %vm232, -1.0, 0.0
    %v284 = vsel %vm233, -1.0, 0.0
    %v285 = vsel %vm234, -1.0, 0.0
    %v286 = vsel %vm235, -1.0, 0.0
    %v287 = vsel %vm236, -1.0, 0.0
    %v288 = vsel %vm237, -1.0, 0.0
    %v289 = vsel %vm238, -1.0, 0.0
    %v290 = vsel %vm239, -1.0, 0.0
    %v291 = vsel %vm240, -1.0, 0.0
    %v292 = vsel %vm241, -1.0, 0.0
    %v293 = vsel %vm242, -1.0, 0.0
    %v294 = vsel %vm243, -1.0, 0.0
    %v295 = vsel %vm244, -1.0, 0.0
    %v296 = vsel %vm245, -1.0, 0.0
    %v297 = vsel %vm246, -1.0, 0.0
    %v298 = vsel %vm247, -1.0, 0.0
    %v299 = vsel %vm248, -1.0, 0.0
    %v300 = vsel %vm249, -1.0, 0.0
    %v301 = vsel %vm250, -1.0, 0.0
    %v302 = vsel %vm251, -1.0, 0.0
    %v303 = vsel %vm252, -1.0, 0.0
    %v304 = vsel %vm253, -1.0, 0.0
    %v305 = vsel %vm254, -1.0, 0.0
    %v306 = vsel %vm255, -1.0, 0.0
    %v307 = vsel %vm256, -1.0, 0.0
    %v308 = vsel %vm257, -1.0, 0.0
    %v309 = vsel %vm258, -1.0, 0.0
    %v310 = vsel %vm259, -1.0, 0.0
    %v311 = vsel %vm260, -1.0, 0.0
    %v312 = vsel %vm261, -1.0, 0.0
    %v313 = vsel %vm262, -1.0, 0.0
    %v314 = vsel %vm263, -1.0, 0.0
    %v315 = vsel %vm264, -1.0, 0.0
    %v316 = vsel %vm163, 1.0, %v265
    %v317 = vsel %vm164, 1.0, %v266
    %v318 = vsel %vm165, 1.0, %v267
    %v319 = vsel %vm166, 1.0, %v268
    %v320 = vsel %vm167, 1.0, %v269
    %v321 = vsel %vm168, 1.0, %v270
    %v322 = vsel %vm169, 1.0, %v271
    %v323 = vsel %vm170, 1.0, %v272
    %v324 = vsel %vm171, 1.0, %v273
    %v325 = vsel %vm172, 1.0, %v274
    %v326 = vsel %vm173, 1.0, %v275
    %v327 = vsel %vm174, 1.0, %v276
    %v328 = vsel %vm175, 1.0, %v277
    %v329 = vsel %vm176, 1.0, %v278
    %v330 = vsel %vm177, 1.0, %v279
    %v331 = vsel %vm178, 1.0, %v280
    %v332 = vsel %vm179, 1.0, %v281
    %v333 = vsel %vm180, 1.0, %v282
    %v334 = vsel %vm181, 1.0, %v283
    %v335 = vsel %vm182, 1.0, %v284
    %v336 = vsel %vm183, 1.0, %v285
    %v337 = vsel %vm184, 1.0, %v286
    %v338 = vsel %vm185, 1.0, %v287
    %v339 = vsel %vm186, 1.0, %v288
    %v340 = vsel %vm187, 1.0, %v289
    %v341 = vsel %vm188, 1.0, %v290
    %v342 = vsel %vm189, 1.0, %v291
    %v343 = vsel %vm190, 1.0, %v292
    %v344 = vsel %vm191, 1.0, %v293
    %v345 = vsel %vm192, 1.0, %v294
    %v346 = vsel %vm193, 1.0, %v295
    %v347 = vsel %vm194, 1.0, %v296
    %v348 = vsel %vm195, 1.0, %v297
    %v349 = vsel %vm196, 1.0, %v298
    %v350 = vsel %vm197, 1.0, %v299
    %v351 = vsel %vm198, 1.0, %v300
    %v352 = vsel %vm199, 1.0, %v301
    %v353 = vsel %vm200, 1.0, %v302
    %v354 = vsel %vm201, 1.0, %v303
    %v355 = vsel %vm202, 1.0, %v304
    %v356 = vsel %vm203, 1.0, %v305
    %v357 = vsel %vm204, 1.0, %v306
    %v358 = vsel %vm205, 1.0, %v307
    %v359 = vsel %vm206, 1.0, %v308
    %v360 = vsel %vm207, 1.0, %v309
    %v361 = vsel %vm208, 1.0, %v310
    %v362 = vsel %vm209, 1.0, %v311
    %v363 = vsel %vm210, 1.0, %v312
    %v364 = vsel %vm211, 1.0, %v313
    %v365 = vsel %vm212, 1.0, %v314
    %v366 = vsel %vm213, 1.0, %v315
    %vm367 = vcmp.gt.f32.partialorder %v115, 0.0
    %vm368 = vcmp.gt.f32.partialorder %v116, 0.0
    %vm369 = vcmp.gt.f32.partialorder %v117, 0.0
    %vm370 = vcmp.gt.f32.partialorder %v118, 0.0
    %vm371 = vcmp.gt.f32.partialorder %v119, 0.0
    %vm372 = vcmp.gt.f32.partialorder %v120, 0.0
    %vm373 = vcmp.gt.f32.partialorder %v121, 0.0
    %vm374 = vcmp.gt.f32.partialorder %v122, 0.0
    %vm375 = vcmp.gt.f32.partialorder %v123, 0.0
    %vm376 = vcmp.gt.f32.partialorder %v124, 0.0
    %vm377 = vcmp.gt.f32.partialorder %v125, 0.0
    %vm378 = vcmp.gt.f32.partialorder %v126, 0.0
    %vm379 = vcmp.gt.f32.partialorder %v127, 0.0
    %vm380 = vcmp.gt.f32.partialorder %v128, 0.0
    %vm381 = vcmp.gt.f32.partialorder %v129, 0.0
    %vm382 = vcmp.gt.f32.partialorder %v130, 0.0
    %vm383 = vcmp.gt.f32.partialorder %v131, 0.0
    %vm384 = vcmp.gt.f32.partialorder %v132, 0.0
    %vm385 = vcmp.gt.f32.partialorder %v133, 0.0
    %vm386 = vcmp.gt.f32.partialorder %v134, 0.0
    %vm387 = vcmp.gt.f32.partialorder %v135, 0.0
    %vm388 = vcmp.gt.f32.partialorder %v136, 0.0
    %vm389 = vcmp.gt.f32.partialorder %v137, 0.0
    %vm390 = vcmp.gt.f32.partialorder %v138, 0.0
    %vm391 = vcmp.gt.f32.partialorder %v139, 0.0
    %vm392 = vcmp.gt.f32.partialorder %v140, 0.0
    %vm393 = vcmp.gt.f32.partialorder %v141, 0.0
    %vm394 = vcmp.gt.f32.partialorder %v142, 0.0
    %vm395 = vcmp.gt.f32.partialorder %v143, 0.0
    %vm396 = vcmp.gt.f32.partialorder %v144, 0.0
    %vm397 = vcmp.gt.f32.partialorder %v145, 0.0
    %vm398 = vcmp.gt.f32.partialorder %v146, 0.0
    %vm399 = vcmp.gt.f32.partialorder %v147, 0.0
    %vm400 = vcmp.gt.f32.partialorder %v148, 0.0
    %vm401 = vcmp.gt.f32.partialorder %v149, 0.0
    %vm402 = vcmp.gt.f32.partialorder %v150, 0.0
    %vm403 = vcmp.gt.f32.partialorder %v151, 0.0
    %vm404 = vcmp.gt.f32.partialorder %v152, 0.0
    %vm405 = vcmp.gt.f32.partialorder %v153, 0.0
    %vm406 = vcmp.gt.f32.partialorder %v154, 0.0
    %vm407 = vcmp.gt.f32.partialorder %v155, 0.0
    %vm408 = vcmp.gt.f32.partialorder %v156, 0.0
    %vm409 = vcmp.gt.f32.partialorder %v157, 0.0
    %vm410 = vcmp.gt.f32.partialorder %v158, 0.0
    %vm411 = vcmp.gt.f32.partialorder %v159, 0.0
    %vm412 = vcmp.gt.f32.partialorder %v160, 0.0
    %vm413 = vcmp.gt.f32.partialorder %v161, 0.0
    %vm414 = vcmp.gt.f32.partialorder %v162, 0.0
    %vm415 = vcmp.lt.f32.partialorder %v115, 0.0
    %vm416 = vcmp.lt.f32.partialorder %v116, 0.0
    %vm417 = vcmp.lt.f32.partialorder %v117, 0.0
    %vm418 = vcmp.lt.f32.partialorder %v118, 0.0
    %vm419 = vcmp.lt.f32.partialorder %v119, 0.0
    %vm420 = vcmp.lt.f32.partialorder %v120, 0.0
    %vm421 = vcmp.lt.f32.partialorder %v121, 0.0
    %vm422 = vcmp.lt.f32.partialorder %v122, 0.0
    %vm423 = vcmp.lt.f32.partialorder %v123, 0.0
    %vm424 = vcmp.lt.f32.partialorder %v124, 0.0
    %vm425 = vcmp.lt.f32.partialorder %v125, 0.0
    %vm426 = vcmp.lt.f32.partialorder %v126, 0.0
    %vm427 = vcmp.lt.f32.partialorder %v127, 0.0
    %vm428 = vcmp.lt.f32.partialorder %v128, 0.0
    %vm429 = vcmp.lt.f32.partialorder %v129, 0.0
    %vm430 = vcmp.lt.f32.partialorder %v130, 0.0
    %vm431 = vcmp.lt.f32.partialorder %v131, 0.0
    %vm432 = vcmp.lt.f32.partialorder %v132, 0.0
    %vm433 = vcmp.lt.f32.partialorder %v133, 0.0
    %vm434 = vcmp.lt.f32.partialorder %v134, 0.0
    %vm435 = vcmp.lt.f32.partialorder %v135, 0.0
    %vm436 = vcmp.lt.f32.partialorder %v136, 0.0
    %vm437 = vcmp.lt.f32.partialorder %v137, 0.0
    %vm438 = vcmp.lt.f32.partialorder %v138, 0.0
    %vm439 = vcmp.lt.f32.partialorder %v139, 0.0
    %vm440 = vcmp.lt.f32.partialorder %v140, 0.0
    %vm441 = vcmp.lt.f32.partialorder %v141, 0.0
    %vm442 = vcmp.lt.f32.partialorder %v142, 0.0
    %vm443 = vcmp.lt.f32.partialorder %v143, 0.0
    %vm444 = vcmp.lt.f32.partialorder %v144, 0.0
    %vm445 = vcmp.lt.f32.partialorder %v145, 0.0
    %vm446 = vcmp.lt.f32.partialorder %v146, 0.0
    %vm447 = vcmp.lt.f32.partialorder %v147, 0.0
    %vm448 = vcmp.lt.f32.partialorder %v148, 0.0
    %vm449 = vcmp.lt.f32.partialorder %v149, 0.0
    %vm450 = vcmp.lt.f32.partialorder %v150, 0.0
    %vm451 = vcmp.lt.f32.partialorder %v151, 0.0
    %vm452 = vcmp.lt.f32.partialorder %v152, 0.0
    %vm453 = vcmp.lt.f32.partialorder %v153, 0.0
    %vm454 = vcmp.lt.f32.partialorder %v154, 0.0
    %vm455 = vcmp.lt.f32.partialorder %v155, 0.0
    %vm456 = vcmp.lt.f32.partialorder %v156, 0.0
    %vm457 = vcmp.lt.f32.partialorder %v157, 0.0
    %vm458 = vcmp.lt.f32.partialorder %v158, 0.0
    %vm459 = vcmp.lt.f32.partialorder %v159, 0.0
    %vm460 = vcmp.lt.f32.partialorder %v160, 0.0
    %vm461 = vcmp.lt.f32.partialorder %v161, 0.0
    %vm462 = vcmp.lt.f32.partialorder %v162, 0.0
    %v463 = vsel %vm415, -1.0, 0.0
    %v464 = vsel %vm416, -1.0, 0.0
    %v465 = vsel %vm417, -1.0, 0.0
    %v466 = vsel %vm418, -1.0, 0.0
    %v467 = vsel %vm419, -1.0, 0.0
    %v468 = vsel %vm420, -1.0, 0.0
    %v469 = vsel %vm421, -1.0, 0.0
    %v470 = vsel %vm422, -1.0, 0.0
    %v471 = vsel %vm423, -1.0, 0.0
    %v472 = vsel %vm424, -1.0, 0.0
    %v473 = vsel %vm425, -1.0, 0.0
    %v474 = vsel %vm426, -1.0, 0.0
    %v475 = vsel %vm427, -1.0, 0.0
    %v476 = vsel %vm428, -1.0, 0.0
    %v477 = vsel %vm429, -1.0, 0.0
    %v478 = vsel %vm430, -1.0, 0.0
    %v479 = vsel %vm431, -1.0, 0.0
    %v480 = vsel %vm432, -1.0, 0.0
    %v481 = vsel %vm433, -1.0, 0.0
    %v482 = vsel %vm434, -1.0, 0.0
    %v483 = vsel %vm435, -1.0, 0.0
    %v484 = vsel %vm436, -1.0, 0.0
    %v485 = vsel %vm437, -1.0, 0.0
    %v486 = vsel %vm438, -1.0, 0.0
    %v487 = vsel %vm439, -1.0, 0.0
    %v488 = vsel %vm440, -1.0, 0.0
    %v489 = vsel %vm441, -1.0, 0.0
    %v490 = vsel %vm442, -1.0, 0.0
    %v491 = vsel %vm443, -1.0, 0.0
    %v492 = vsel %vm444, -1.0, 0.0
    %v493 = vsel %vm445, -1.0, 0.0
    %v494 = vsel %vm446, -1.0, 0.0
    %v495 = vsel %vm447, -1.0, 0.0
    %v496 = vsel %vm448, -1.0, 0.0
    %v497 = vsel %vm449, -1.0, 0.0
    %v498 = vsel %vm450, -1.0, 0.0
    %v499 = vsel %vm451, -1.0, 0.0
    %v500 = vsel %vm452, -1.0, 0.0
    %v501 = vsel %vm453, -1.0, 0.0
    %v502 = vsel %vm454, -1.0, 0.0
    %v503 = vsel %vm455, -1.0, 0.0
    %v504 = vsel %vm456, -1.0, 0.0
    %v505 = vsel %vm457, -1.0, 0.0
    %v506 = vsel %vm458, -1.0, 0.0
    %v507 = vsel %vm459, -1.0, 0.0
    %v508 = vsel %vm460, -1.0, 0.0
    %v509 = vsel %vm461, -1.0, 0.0
    %v510 = vsel %vm462, -1.0, 0.0
    %v511 = vsel %vm367, 1.0, %v463
    %v512 = vsel %vm368, 1.0, %v464
    %v513 = vsel %vm369, 1.0, %v465
    %v514 = vsel %vm370, 1.0, %v466
    %v515 = vsel %vm371, 1.0, %v467
    %v516 = vsel %vm372, 1.0, %v468
    %v517 = vsel %vm373, 1.0, %v469
    %v518 = vsel %vm374, 1.0, %v470
    %v519 = vsel %vm375, 1.0, %v471
    %v520 = vsel %vm376, 1.0, %v472
    %v521 = vsel %vm377, 1.0, %v473
    %v522 = vsel %vm378, 1.0, %v474
    %v523 = vsel %vm379, 1.0, %v475
    %v524 = vsel %vm380, 1.0, %v476
    %v525 = vsel %vm381, 1.0, %v477
    %v526 = vsel %vm382, 1.0, %v478
    %v527 = vsel %vm383, 1.0, %v479
    %v528 = vsel %vm384, 1.0, %v480
    %v529 = vsel %vm385, 1.0, %v481
    %v530 = vsel %vm386, 1.0, %v482
    %v531 = vsel %vm387, 1.0, %v483
    %v532 = vsel %vm388, 1.0, %v484
    %v533 = vsel %vm389, 1.0, %v485
    %v534 = vsel %vm390, 1.0, %v486
    %v535 = vsel %vm391, 1.0, %v487
    %v536 = vsel %vm392, 1.0, %v488
    %v537 = vsel %vm393, 1.0, %v489
    %v538 = vsel %vm394, 1.0, %v490
    %v539 = vsel %vm395, 1.0, %v491
    %v540 = vsel %vm396, 1.0, %v492
    %v541 = vsel %vm397, 1.0, %v493
    %v542 = vsel %vm398, 1.0, %v494
    %v543 = vsel %vm399, 1.0, %v495
    %v544 = vsel %vm400, 1.0, %v496
    %v545 = vsel %vm401, 1.0, %v497
    %v546 = vsel %vm402, 1.0, %v498
    %v547 = vsel %vm403, 1.0, %v499
    %v548 = vsel %vm404, 1.0, %v500
    %v549 = vsel %vm405, 1.0, %v501
    %v550 = vsel %vm406, 1.0, %v502
    %v551 = vsel %vm407, 1.0, %v503
    %v552 = vsel %vm408, 1.0, %v504
    %v553 = vsel %vm409, 1.0, %v505
    %v554 = vsel %vm410, 1.0, %v506
    %v555 = vsel %vm411, 1.0, %v507
    %v556 = vsel %vm412, 1.0, %v508
    %v557 = vsel %vm413, 1.0, %v509
    %v558 = vsel %vm414, 1.0, %v510
    %v559 = vld [vmem:[#allocation2] sm:$0xff]
    %v560 = vld [vmem:[#allocation2 + $0x8] sm:$0xff]
    %v561 = vld [vmem:[#allocation2 + $0x10] sm:$0xff]
    %v562 = vld [vmem:[#allocation2 + $0x18] sm:$0xff]
    %v563 = vld [vmem:[#allocation2 + $0x20] sm:$0xff]
    %v564 = vld [vmem:[#allocation2 + $0x28] sm:$0xff]
    %v565 = vld [vmem:[#allocation2 + $0x30] sm:$0xff]
    %v566 = vld [vmem:[#allocation2 + $0x38] sm:$0xff]
    %v567 = vld [vmem:[#allocation2 + $0x40] sm:$0xff]
    %v568 = vld [vmem:[#allocation2 + $0x48] sm:$0xff]
    %v569 = vld [vmem:[#allocation2 + $0x50] sm:$0xff]
    %v570 = vld [vmem:[#allocation2 + $0x58] sm:$0xff]
    %v571 = vld [vmem:[#allocation2 + $0x60] sm:$0xff]
    %v572 = vld [vmem:[#allocation2 + $0x68] sm:$0xff]
    %v573 = vld [vmem:[#allocation2 + $0x70] sm:$0xff]
    %v574 = vld [vmem:[#allocation2 + $0x78] sm:$0xff]
    %v575 = vld [vmem:[#allocation2 + $0x80] sm:$0xff]
    %576 = vmatprep.subr.mxu0 0.0
    %577 = vmatpush1.msra.mxu0 %v511
    %578 = vmatprep.subr.mxu0 0.0
    %579 = vmatpush1.msra.mxu0 %v512
    %580 = vmatprep.subr.mxu0 0.0
    %581 = vmatpush1.msra.mxu0 %v513
    %582 = vmatprep.subr.mxu0 0.0
    %583 = vmatpush1.msra.mxu0 %v514
    %584 = vmatprep.subr.mxu0 0.0
    %585 = vmatpush1.msra.mxu0 %v515
    %586 = vmatprep.subr.mxu0 0.0
    %587 = vmatpush1.msra.mxu0 %v516
    %588 = vmatprep.subr.mxu0 0.0
    %589 = vmatpush1.msra.mxu0 %v517
    %590 = vmatprep.subr.mxu0 0.0
    %591 = vmatpush1.msra.mxu0 %v518
    %592 = vmatprep.subr.mxu0 0.0
    %593 = vmatpush1.msra.mxu0 %v519
    %594 = vmatprep.subr.mxu0 0.0
    %595 = vmatpush1.msra.mxu0 %v520
    %596 = vmatprep.subr.mxu0 0.0
    %597 = vmatpush1.msra.mxu0 %v521
    %598 = vmatprep.subr.mxu0 0.0
    %599 = vmatpush1.msra.mxu0 %v522
    %600 = vmatprep.subr.mxu0 0.0
    %601 = vmatpush1.msra.mxu0 %v523
    %602 = vmatprep.subr.mxu0 0.0
    %603 = vmatpush1.msra.mxu0 %v524
    %604 = vmatprep.subr.mxu0 0.0
    %605 = vmatpush1.msra.mxu0 %v525
    %606 = vmatprep.subr.mxu0 0.0
    %607 = vmatpush1.msra.mxu0 %v526
    %608 = vmatprep.subr.mxu0 0.0
    %609 = vmatpush1.msra.mxu0 %v527
    %610 = vmatprep.subr.mxu0 0.0
    %611 = vmatpush1.msra.mxu0 %v528
    %612 = vmatprep.subr.mxu0 0.0
    %613 = vmatpush1.msra.mxu0 %v529
    %614 = vmatprep.subr.mxu0 0.0
    %615 = vmatpush1.msra.mxu0 %v530
    %616 = vmatprep.subr.mxu0 0.0
    %617 = vmatpush1.msra.mxu0 %v531
    %618 = vmatprep.subr.mxu0 0.0
    %619 = vmatpush1.msra.mxu0 %v532
    %620 = vmatprep.subr.mxu0 0.0
    %621 = vmatpush1.msra.mxu0 %v533
    %622 = vmatprep.subr.mxu0 0.0
    %623 = vmatpush1.msra.mxu0 %v534
    %624 = vmatprep.subr.mxu0 0.0
    %625 = vmatpush1.msra.mxu0 %v535
    %626 = vmatprep.subr.mxu0 0.0
    %627 = vmatpush1.msra.mxu0 %v536
    %628 = vmatprep.subr.mxu0 0.0
    %629 = vmatpush1.msra.mxu0 %v537
    %630 = vmatprep.subr.mxu0 0.0
    %631 = vmatpush1.msra.mxu0 %v538
    %632 = vmatprep.subr.mxu0 0.0
    %633 = vmatpush1.msra.mxu0 %v539
    %634 = vmatprep.subr.mxu0 0.0
    %635 = vmatpush1.msra.mxu0 %v540
    %636 = vmatprep.subr.mxu0 0.0
    %637 = vmatpush1.msra.mxu0 %v541
    %638 = vmatprep.subr.mxu0 0.0
    %639 = vmatpush1.msra.mxu0 %v542
    %640 = vmatprep.mubr.f32.mxu0 %v317
    %641 = vmatmul.mubr.f32.gmra.mrb[0].mxu0 %v316
    %v642 = vpop.f32.mrb[0].mxu0
    %v643 = vadd.f32 0.0, %v642
    %v644 = vpop.f32.mrb[0].mxu0
    %645 = vmatprep.mubr.f32.mxu0 %v320
    %646 = vmatmul.mubr.f32.gmra.mrb[0].mxu0 %v319
    %v647 = vpop.f32.mrb[0].mxu0
    %v648 = vadd.f32 0.0, %v647
    %v649 = vpop.f32.mrb[0].mxu0
    %650 = vmatprep.mubr.f32.mxu0 %v323
    %651 = vmatmul.mubr.f32.gmra.mrb[0].mxu0 %v322
    %v652 = vpop.f32.mrb[0].mxu0
    %v653 = vadd.f32 0.0, %v652
    %v654 = vpop.f32.mrb[0].mxu0
    %655 = vmatprep.mubr.f32.mxu0 %v326
    %656 = vmatmul.mubr.f32.gmra.mrb[0].mxu0 %v325
    %v657 = vpop.f32.mrb[0].mxu0
    %v658 = vadd.f32 0.0, %v657
    %v659 = vpop.f32.mrb[0].mxu0
    %660 = vmatprep.mubr.f32.mxu0 %v329
    %661 = vmatmul.mubr.f32.gmra.mrb[0].mxu0 %v328
    %v662 = vpop.f32.mrb[0].mxu0
    %v663 = vadd.f32 0.0, %v662
    %v664 = vpop.f32.mrb[0].mxu0
    %665 = vmatprep.mubr.f32.mxu0 %v332
    %666 = vmatmul.mubr.f32.gmra.mrb[0].mxu0 %v331
    %v667 = vpop.f32.mrb[0].mxu0
    %v668 = vadd.f32 0.0, %v667
    %v669 = vpop.f32.mrb[0].mxu0
    %670 = vmatprep.mubr.f32.mxu0 %v335
    %671 = vmatmul.mubr.f32.gmra.mrb[0].mxu0 %v334
    %v672 = vpop.f32.mrb[0].mxu0
    %v673 = vadd.f32 0.0, %v672
    %v674 = vpop.f32.mrb[0].mxu0
    %675 = vmatprep.mubr.f32.mxu0 %v338
    %676 = vmatmul.mubr.f32.gmra.mrb[0].mxu0 %v337
    %v677 = vpop.f32.mrb[0].mxu0
    %v678 = vadd.f32 0.0, %v677
    %v679 = vpop.f32.mrb[0].mxu0
    %680 = vmatprep.mubr.f32.mxu0 %v341
    %681 = vmatmul.mubr.f32.gmra.mrb[0].mxu0 %v340
    %v682 = vpop.f32.mrb[0].mxu0
    %v683 = vadd.f32 0.0, %v682
    %v684 = vpop.f32.mrb[0].mxu0
    %685 = vmatprep.mubr.f32.mxu0 %v344
    %686 = vmatmul.mubr.f32.gmra.mrb[0].mxu0 %v343
    %v687 = vpop.f32.mrb[0].mxu0
    %v688 = vadd.f32 0.0, %v687
    %v689 = vpop.f32.mrb[0].mxu0
    %690 = vmatprep.mubr.f32.mxu0 %v347
    %691 = vmatmul.mubr.f32.gmra.mrb[0].mxu0 %v346
    %v692 = vpop.f32.mrb[0].mxu0
    %v693 = vadd.f32 0.0, %v692
    %v694 = vpop.f32.mrb[0].mxu0
    %695 = vmatprep.mubr.f32.mxu0 %v350
    %696 = vmatmul.mubr.f32.gmra.mrb[0].mxu0 %v349
    %v697 = vpop.f32.mrb[0].mxu0
    %v698 = vadd.f32 0.0, %v697
    %v699 = vpop.f32.mrb[0].mxu0
    %700 = vmatprep.mubr.f32.mxu0 %v353
    %701 = vmatmul.mubr.f32.gmra.mrb[0].mxu0 %v352
    %v702 = vpop.f32.mrb[0].mxu0
    %v703 = vadd.f32 0.0, %v702
    %v704 = vpop.f32.mrb[0].mxu0
    %705 = vmatprep.mubr.f32.mxu0 %v356
    %706 = vmatmul.mubr.f32.gmra.mrb[0].mxu0 %v355
    %v707 = vpop.f32.mrb[0].mxu0
    %v708 = vadd.f32 0.0, %v707
    %v709 = vpop.f32.mrb[0].mxu0
    %710 = vmatprep.mubr.f32.mxu0 %v359
    %711 = vmatmul.mubr.f32.gmra.mrb[0].mxu0 %v358
    %v712 = vpop.f32.mrb[0].mxu0
    %v713 = vadd.f32 0.0, %v712
    %v714 = vpop.f32.mrb[0].mxu0
    %715 = vmatprep.mubr.f32.mxu0 %v362
    %716 = vmatmul.mubr.f32.gmra.mrb[0].mxu0 %v361
    %v717 = vpop.f32.mrb[0].mxu0
    %v718 = vadd.f32 0.0, %v717
    %v719 = vpop.f32.mrb[0].mxu0
    %720 = vmatprep.mubr.f32.mxu0 %v365
    %721 = vmatmul.mubr.f32.gmra.mrb[0].mxu0 %v364
    %v722 = vpop.f32.mrb[0].mxu0
    %v723 = vadd.f32 0.0, %v722
    %v724 = vpop.f32.mrb[0].mxu0
    %725 = vdwg.mxu0
    %726 = vmatprep.subr.mxu0 0.0
    %727 = vmatpush1.msra.mxu0 %v543
    %728 = vmatprep.subr.mxu0 0.0
    %729 = vmatpush1.msra.mxu0 %v544
    %730 = vmatprep.subr.mxu0 0.0
    %731 = vmatpush1.msra.mxu0 %v545
    %732 = vmatprep.subr.mxu0 0.0
    %733 = vmatpush1.msra.mxu0 %v546
    %734 = vmatprep.subr.mxu0 0.0
    %735 = vmatpush1.msra.mxu0 %v547
    %736 = vmatprep.subr.mxu0 0.0
    %737 = vmatpush1.msra.mxu0 %v548
    %738 = vmatprep.subr.mxu0 0.0
    %739 = vmatpush1.msra.mxu0 %v549
    %740 = vmatprep.subr.mxu0 0.0
    %741 = vmatpush1.msra.mxu0 %v550
    %742 = vmatprep.subr.mxu0 0.0
    %743 = vmatpush1.msra.mxu0 %v551
    %744 = vmatprep.subr.mxu0 0.0
    %745 = vmatpush1.msra.mxu0 %v552
    %746 = vmatprep.subr.mxu0 0.0
    %747 = vmatpush1.msra.mxu0 %v553
    %748 = vmatprep.subr.mxu0 0.0
    %749 = vmatpush1.msra.mxu0 %v554
    %750 = vmatprep.subr.mxu0 0.0
    %751 = vmatpush1.msra.mxu0 %v555
    %752 = vmatprep.subr.mxu0 0.0
    %753 = vmatpush1.msra.mxu0 %v556
    %754 = vmatprep.subr.mxu0 0.0
    %755 = vmatpush1.msra.mxu0 %v557
    %756 = vmatprep.subr.mxu0 0.0
    %757 = vmatpush1.msra.mxu0 %v558
    %758 = vmatprep.subr.mxu0 0.0
    %759 = vmatpush1.msra.mxu0 0.0
    %760 = vmatprep.subr.mxu0 0.0
    %761 = vmatpush1.msra.mxu0 0.0
    %762 = vmatprep.subr.mxu0 0.0
    %763 = vmatpush1.msra.mxu0 0.0
    %764 = vmatprep.subr.mxu0 0.0
    %765 = vmatpush1.msra.mxu0 0.0
    %766 = vmatprep.subr.mxu0 0.0
    %767 = vmatpush1.msra.mxu0 0.0
    %768 = vmatprep.subr.mxu0 0.0
    %769 = vmatpush1.msra.mxu0 0.0
    %770 = vmatprep.subr.mxu0 0.0
    %771 = vmatpush1.msra.mxu0 0.0
    %772 = vmatprep.subr.mxu0 0.0
    %773 = vmatpush1.msra.mxu0 0.0
    %774 = vmatprep.subr.mxu0 0.0
    %775 = vmatpush1.msra.mxu0 0.0
    %776 = vmatprep.subr.mxu0 0.0
    %777 = vmatpush1.msra.mxu0 0.0
    %778 = vmatprep.subr.mxu0 0.0
    %779 = vmatpush1.msra.mxu0 0.0
    %780 = vmatprep.subr.mxu0 0.0
    %781 = vmatpush1.msra.mxu0 0.0
    %782 = vmatprep.subr.mxu0 0.0
    %783 = vmatpush1.msra.mxu0 0.0
    %784 = vmatprep.subr.mxu0 0.0
    %785 = vmatpush1.msra.mxu0 0.0
    %786 = vmatprep.subr.mxu0 0.0
    %787 = vmatpush1.msra.mxu0 0.0
    %788 = vmatprep.subr.mxu0 0.0
    %789 = vmatpush1.msra.mxu0 0.0
    %790 = vmatprep.mubr.f32.mxu0 0.0
    %791 = vmatmul.mubr.f32.gmra.mrb[0].mxu0 %v318
    %v792 = vpop.f32.mrb[0].mxu0
    %v793 = vadd.f32 %v643, %v792
    %v794 = vpop.f32.mrb[0].mxu0
    %795 = vmatprep.mubr.f32.mxu0 0.0
    %796 = vmatmul.mubr.f32.gmra.mrb[0].mxu0 %v321
    %v797 = vpop.f32.mrb[0].mxu0
    %v798 = vadd.f32 %v648, %v797
    %v799 = vpop.f32.mrb[0].mxu0
    %800 = vmatprep.mubr.f32.mxu0 0.0
    %801 = vmatmul.mubr.f32.gmra.mrb[0].mxu0 %v324
    %v802 = vpop.f32.mrb[0].mxu0
    %v803 = vadd.f32 %v653, %v802
    %v804 = vpop.f32.mrb[0].mxu0
    %805 = vmatprep.mubr.f32.mxu0 0.0
    %806 = vmatmul.mubr.f32.gmra.mrb[0].mxu0 %v327
    %v807 = vpop.f32.mrb[0].mxu0
    %v808 = vadd.f32 %v658, %v807
    %v809 = vpop.f32.mrb[0].mxu0
    %810 = vmatprep.mubr.f32.mxu0 0.0
    %811 = vmatmul.mubr.f32.gmra.mrb[0].mxu0 %v330
    %v812 = vpop.f32.mrb[0].mxu0
    %v813 = vadd.f32 %v663, %v812
    %v814 = vpop.f32.mrb[0].mxu0
    %815 = vmatprep.mubr.f32.mxu0 0.0
    %816 = vmatmul.mubr.f32.gmra.mrb[0].mxu0 %v333
    %v817 = vpop.f32.mrb[0].mxu0
    %v818 = vadd.f32 %v668, %v817
    %v819 = vpop.f32.mrb[0].mxu0
    %820 = vmatprep.mubr.f32.mxu0 0.0
    %821 = vmatmul.mubr.f32.gmra.mrb[0].mxu0 %v336
    %v822 = vpop.f32.mrb[0].mxu0
    %v823 = vadd.f32 %v673, %v822
    %v824 = vpop.f32.mrb[0].mxu0
    %825 = vmatprep.mubr.f32.mxu0 0.0
    %826 = vmatmul.mubr.f32.gmra.mrb[0].mxu0 %v339
    %v827 = vpop.f32.mrb[0].mxu0
    %v828 = vadd.f32 %v678, %v827
    %v829 = vpop.f32.mrb[0].mxu0
    %830 = vmatprep.mubr.f32.mxu0 0.0
    %831 = vmatmul.mubr.f32.gmra.mrb[0].mxu0 %v342
    %v832 = vpop.f32.mrb[0].mxu0
    %v833 = vadd.f32 %v683, %v832
    %v834 = vpop.f32.mrb[0].mxu0
    %835 = vmatprep.mubr.f32.mxu0 0.0
    %836 = vmatmul.mubr.f32.gmra.mrb[0].mxu0 %v345
    %v837 = vpop.f32.mrb[0].mxu0
    %v838 = vadd.f32 %v688, %v837
    %v839 = vpop.f32.mrb[0].mxu0
    %840 = vmatprep.mubr.f32.mxu0 0.0
    %841 = vmatmul.mubr.f32.gmra.mrb[0].mxu0 %v348
    %v842 = vpop.f32.mrb[0].mxu0
    %v843 = vadd.f32 %v693, %v842
    %v844 = vpop.f32.mrb[0].mxu0
    %845 = vmatprep.mubr.f32.mxu0 0.0
    %846 = vmatmul.mubr.f32.gmra.mrb[0].mxu0 %v351
    %v847 = vpop.f32.mrb[0].mxu0
    %v848 = vadd.f32 %v698, %v847
    %v849 = vpop.f32.mrb[0].mxu0
    %850 = vmatprep.mubr.f32.mxu0 0.0
    %851 = vmatmul.mubr.f32.gmra.mrb[0].mxu0 %v354
    %v852 = vpop.f32.mrb[0].mxu0
    %v853 = vadd.f32 %v703, %v852
    %v854 = vpop.f32.mrb[0].mxu0
    %855 = vmatprep.mubr.f32.mxu0 0.0
    %856 = vmatmul.mubr.f32.gmra.mrb[0].mxu0 %v357
    %v857 = vpop.f32.mrb[0].mxu0
    %v858 = vadd.f32 %v708, %v857
    %v859 = vpop.f32.mrb[0].mxu0
    %860 = vmatprep.mubr.f32.mxu0 0.0
    %861 = vmatmul.mubr.f32.gmra.mrb[0].mxu0 %v360
    %v862 = vpop.f32.mrb[0].mxu0
    %v863 = vadd.f32 %v713, %v862
    %v864 = vpop.f32.mrb[0].mxu0
    %865 = vmatprep.mubr.f32.mxu0 0.0
    %866 = vmatmul.mubr.f32.gmra.mrb[0].mxu0 %v363
    %v867 = vpop.f32.mrb[0].mxu0
    %v868 = vadd.f32 %v718, %v867
    %v869 = vpop.f32.mrb[0].mxu0
    %870 = vmatprep.mubr.f32.mxu0 0.0
    %871 = vmatmul.mubr.f32.gmra.mrb[0].mxu0 %v366
    %v872 = vpop.f32.mrb[0].mxu0
    %v873 = vadd.f32 %v723, %v872
    %v874 = vpop.f32.mrb[0].mxu0
    %875 = vdwg.mxu0
    %v876 = vadd.f32 %v559, %v793
    %v877 = vadd.f32 %v560, %v798
    %v878 = vadd.f32 %v561, %v803
    %v879 = vadd.f32 %v562, %v808
    %v880 = vadd.f32 %v563, %v813
    %v881 = vadd.f32 %v564, %v818
    %v882 = vadd.f32 %v565, %v823
    %v883 = vadd.f32 %v566, %v828
    %v884 = vadd.f32 %v567, %v833
    %v885 = vadd.f32 %v568, %v838
    %v886 = vadd.f32 %v569, %v843
    %v887 = vadd.f32 %v570, %v848
    %v888 = vadd.f32 %v571, %v853
    %v889 = vadd.f32 %v572, %v858
    %v890 = vadd.f32 %v573, %v863
    %v891 = vadd.f32 %v574, %v868
    %v892 = vadd.f32 %v575, %v873
    %893 = vst [vmem:[#allocation2] sm:$0xff] %v876
    %894 = vst [vmem:[#allocation2 + $0x8] sm:$0xff] %v877
    %895 = vst [vmem:[#allocation2 + $0x10] sm:$0xff] %v878
    %896 = vst [vmem:[#allocation2 + $0x18] sm:$0xff] %v879
    %897 = vst [vmem:[#allocation2 + $0x20] sm:$0xff] %v880
    %898 = vst [vmem:[#allocation2 + $0x28] sm:$0xff] %v881
    %899 = vst [vmem:[#allocation2 + $0x30] sm:$0xff] %v882
    %900 = vst [vmem:[#allocation2 + $0x38] sm:$0xff] %v883
    %901 = vst [vmem:[#allocation2 + $0x40] sm:$0xff] %v884
    %902 = vst [vmem:[#allocation2 + $0x48] sm:$0xff] %v885
    %903 = vst [vmem:[#allocation2 + $0x50] sm:$0xff] %v886
    %904 = vst [vmem:[#allocation2 + $0x58] sm:$0xff] %v887
    %905 = vst [vmem:[#allocation2 + $0x60] sm:$0xff] %v888
    %906 = vst [vmem:[#allocation2 + $0x68] sm:$0xff] %v889
    %907 = vst [vmem:[#allocation2 + $0x70] sm:$0xff] %v890
    %908 = vst [vmem:[#allocation2 + $0x78] sm:$0xff] %v891
    %909 = vst [vmem:[#allocation2 + $0x80] sm:$0xff] %v892
    // Predicated region
    $region26: #{tpu_custom_call.1} parent=1 // pred_check
      %p910 = pneg %p43
    $region27: #{tpu_custom_call.1} parent=1 // pred_check_branch
      %912 = sbr.rel (%p910) target = $region29
    $region28: #{tpu_custom_call.1} parent=1 // pred_region
      %v913 = vld [vmem:[#allocation2] sm:$0xff]
      %v914 = vld [vmem:[#allocation2 + $0x8] sm:$0xff]
      %v915 = vld [vmem:[#allocation2 + $0x10] sm:$0xff]
      %v916 = vld [vmem:[#allocation2 + $0x18] sm:$0xff]
      %v917 = vld [vmem:[#allocation2 + $0x20] sm:$0xff]
      %v918 = vld [vmem:[#allocation2 + $0x28] sm:$0xff]
      %v919 = vld [vmem:[#allocation2 + $0x30] sm:$0xff]
      %v920 = vld [vmem:[#allocation2 + $0x38] sm:$0xff]
      %v921 = vld [vmem:[#allocation2 + $0x40] sm:$0xff]
      %v922 = vld [vmem:[#allocation2 + $0x48] sm:$0xff]
      %v923 = vld [vmem:[#allocation2 + $0x50] sm:$0xff]
      %v924 = vld [vmem:[#allocation2 + $0x58] sm:$0xff]
      %v925 = vld [vmem:[#allocation2 + $0x60] sm:$0xff]
      %v926 = vld [vmem:[#allocation2 + $0x68] sm:$0xff]
      %v927 = vld [vmem:[#allocation2 + $0x70] sm:$0xff]
      %v928 = vld [vmem:[#allocation2 + $0x78] sm:$0xff]
      %v929 = vld [vmem:[#allocation2 + $0x80] sm:$0xff]
      %v930 = vld [vmem:[%s2] sm:$0x1]
      %v932 = vlaneseq
      %v933 = vshrl.u32 %v932, 7
      %v934 = vsub.s32 0, %v933
      %v935 = vrot.slane %v930, %v934
      %v937 = vadd.f32 %v913, %v935
      %v938 = vadd.f32 %v914, %v935
      %v939 = vadd.f32 %v915, %v935
      %v940 = vadd.f32 %v916, %v935
      %v941 = vadd.f32 %v917, %v935
      %v942 = vadd.f32 %v918, %v935
      %v943 = vadd.f32 %v919, %v935
      %v944 = vadd.f32 %v920, %v935
      %v945 = vadd.f32 %v921, %v935
      %v946 = vadd.f32 %v922, %v935
      %v947 = vadd.f32 %v923, %v935
      %v948 = vadd.f32 %v924, %v935
      %v949 = vadd.f32 %v925, %v935
      %v950 = vadd.f32 %v926, %v935
      %v951 = vadd.f32 %v927, %v935
      %v952 = vadd.f32 %v928, %v935
      %v953 = vadd.f32 %v929, %v935
      %954 = vst [vmem:[#allocation8] sm:$0xff] %v937
      %955 = vst [vmem:[#allocation8 + $0x8] sm:$0xff] %v938
      %956 = vst [vmem:[#allocation8 + $0x10] sm:$0xff] %v939
      %957 = vst [vmem:[#allocation8 + $0x18] sm:$0xff] %v940
      %958 = vst [vmem:[#allocation8 + $0x20] sm:$0xff] %v941
      %959 = vst [vmem:[#allocation8 + $0x28] sm:$0xff] %v942
      %960 = vst [vmem:[#allocation8 + $0x30] sm:$0xff] %v943
      %961 = vst [vmem:[#allocation8 + $0x38] sm:$0xff] %v944
      %962 = vst [vmem:[#allocation8 + $0x40] sm:$0xff] %v945
      %963 = vst [vmem:[#allocation8 + $0x48] sm:$0xff] %v946
      %964 = vst [vmem:[#allocation8 + $0x50] sm:$0xff] %v947
      %965 = vst [vmem:[#allocation8 + $0x58] sm:$0xff] %v948
      %966 = vst [vmem:[#allocation8 + $0x60] sm:$0xff] %v949
      %967 = vst [vmem:[#allocation8 + $0x68] sm:$0xff] %v950
      %968 = vst [vmem:[#allocation8 + $0x70] sm:$0xff] %v951
      %969 = vst [vmem:[#allocation8 + $0x78] sm:$0xff] %v952
      %970 = vst [vmem:[#allocation8 + $0x80] sm:$0xff] %v953
    $region29: #{tpu_custom_call.1} parent=1 // pred_fallthru
      _
    // Predicated region
    $region30: #{tpu_custom_call.1} parent=1 // pred_check
      _
    $region31: #{tpu_custom_call.1} parent=1 // pred_check_branch
      %972 = sbr.rel (0) target = $region33
    $region32: #{tpu_custom_call.1} parent=1 // pred_region
      %s974 = ssub.s32 2176, 2176
      %975 = vsyncadd [#allocation5], %s974
      %s976 = sshll.u32 [#allocation8], 4
      %s977 = int_to_ptr.vmem [resolvable:$true] %s976
      %982 = dma.vmem_to_hbm [thread:$0]  %s977, 2176, %s3, [#allocation5], 128, 128, 8
    $region33: #{tpu_custom_call.1} parent=1 // pred_fallthru
      _
    // Predicated region
    $region34: #{tpu_custom_call.1} parent=1 // pred_check
      _
    $region35: #{tpu_custom_call.1} parent=1 // pred_check_branch
      %984 = sbr.rel (0) target = $region37
    $region36: #{tpu_custom_call.1} parent=1 // pred_region
      %985 = dma.done [#allocation5], 2176
    $region37: #{tpu_custom_call.1} parent=1 // pred_fallthru
      _
    %986 = vsyncpa [#allocation4], 1
    %987 = vsyncpa [#allocation7], 1
    %988 = vsyncpa [#allocation5], 1

</llo_original>
